<compile_context>
chip_gen: v7x
topology: tpu7x:2x2x1
jax: 0.10.0
libtpu: 0.0.40
codegen_flags: <defaults>
</compile_context>

<pallas_src>
import functools

import jax
import jax.numpy as jnp
from jax import lax
from jax.experimental import pallas as pl
from jax.experimental.pallas import tpu as pltpu


def _cdiv(a, b):
    return -(-a // b)


def _grad_loss_kernel(x_ref, o_ref, *, D, TB, B, ragged, penalty,
                      inv_nd, inv_nh, inv_nw, inner_unroll):
    # x_ref block: (TB*D, H, W) planes, always starting at a volume boundary.
    H, W = x_ref.shape[1], x_ref.shape[2]
    b = pl.program_id(0)

    # Number of valid volumes in this block (ragged last block -> fewer).
    if ragged:
        n_valid = jnp.minimum(TB, B - b * TB)
    else:
        n_valid = TB

    compute_d = inv_nd != 0.0          # static Python bools (degenerate dims
    compute_h = inv_nh != 0.0          # are skipped; see TODO in the wrapper)
    compute_w = inv_nw != 0.0

    def pen(v):
        # Matches the PyTorch module: only the exact string 'l2' squares;
        # anything else falls through to l1 (abs).
        return v * v if penalty == 'l2' else jnp.abs(v)

    def load_plane(p):
        return x_ref[p].astype(jnp.float32)          # (H, W)

    def hw_terms(cur, acc_h, acc_w):
        # Unmasked roll diffs: the spurious wrap term lands exactly in row 0
        # (H axis) / column 0 (W axis) of the accumulator and is dropped once
        # at the end of the block — no per-element select in the hot loop.
        if compute_h:
            acc_h = acc_h + pen(cur - pltpu.roll(cur, shift=1, axis=0))
        if compute_w:
            acc_w = acc_w + pen(cur - pltpu.roll(cur, shift=1, axis=1))
        return acc_h, acc_w

    def volume_body(v, carry):
        acc_d, acc_h, acc_w = carry
        base = v * D
        prev = load_plane(base)                       # d == 0: H/W terms only
        acc_h, acc_w = hw_terms(prev, acc_h, acc_w)

        def d_body(d, inner):
            acc_d, acc_h, acc_w, prev = inner
            cur = load_plane(base + d)
            if compute_d:
                acc_d = acc_d + pen(cur - prev)       # D diff vs previous plane
            acc_h, acc_w = hw_terms(cur, acc_h, acc_w)
            return acc_d, acc_h, acc_w, cur

        if D > 1:
            acc_d, acc_h, acc_w, _ = lax.fori_loop(
                1, D, d_body, (acc_d, acc_h, acc_w, prev), unroll=inner_unroll)
        return acc_d, acc_h, acc_w

    zero = jnp.zeros((H, W), jnp.float32)
    acc_d, acc_h, acc_w = lax.fori_loop(0, n_valid, volume_body,
                                        (zero, zero, zero))

    # Finalize once per block: drop the wrap row/column, scale, combine.
    out = jnp.zeros((H, W), jnp.float32)
    if compute_d:
        out = out + inv_nd * acc_d
    if compute_h:
        row = lax.broadcasted_iota(jnp.int32, (H, W), 0)
        out = out + inv_nh * jnp.where(row >= 1, acc_h, 0.0)
    if compute_w:
        col = lax.broadcasted_iota(jnp.int32, (H, W), 1)
        out = out + inv_nw * jnp.where(col >= 1, acc_w, 0.0)
    o_ref[0] = out


def gradient_loss(x, penalty='l1', *, target_block_bytes=4 * 1024 * 1024):
    """x: (N, C, D, H, W) array. Returns scalar float32 loss (matches gradientLoss)."""
    N, C, D, H, W = x.shape
    B = N * C
    planes = x.reshape(B * D, H, W)           # contiguous reshape: no HBM copy

    # ---- block-size selection -----------------------------------------------
    vol_bytes = D * H * W * x.dtype.itemsize
    tb = int(max(1, min(B, target_block_bytes // max(vol_bytes, 1))))
    # Prefer an exact divisor of B close to the target (no ragged last block).
    for cand in range(tb, 0, -1):
        if B % cand == 0:
            if 2 * cand >= tb:
                tb = cand
            break
    # v7x megacore: keep >= 2 grid steps whenever there is work for two cores.
    if B >= 2 and _cdiv(B, tb) < 2:
        tb = _cdiv(B, 2)
    num_blocks = _cdiv(B, tb)
    ragged = (B % tb) != 0
    tp = tb * D                                # planes per block

    # Reciprocal element counts of each difference tensor.
    # TODO(synk): if D, H or W == 1 the PyTorch reference is mean-of-empty (NaN);
    # here that degenerate term is simply skipped (contributes 0).
    inv_nd = 1.0 / (B * (D - 1) * H * W) if D > 1 else 0.0
    inv_nh = 1.0 / (B * D * (H - 1) * W) if H > 1 else 0.0
    inv_nw = 1.0 / (B * D * H * (W - 1)) if W > 1 else 0.0

    kernel = functools.partial(
        _grad_loss_kernel, D=D, TB=tb, B=B, ragged=ragged, penalty=penalty,
        inv_nd=inv_nd, inv_nh=inv_nh, inv_nw=inv_nw,
        inner_unroll=max(1, min(D - 1, 4)))

    # VMEM budget: double-buffered input block + double-buffered (tiny) output
    # + loop-carried planes/accumulators; leave headroom, cap well below any
    # chip's physical VMEM (v7x has only 64 MiB/TC).
    hw_f32 = H * W * 4
    vmem_need = 2 * tp * H * W * x.dtype.itemsize + 10 * hw_f32 + (1 << 20)
    vmem_limit = int(min(max(2 * vmem_need, 16 * 1024 * 1024),
                         112 * 1024 * 1024))
    # TODO(synk): no intra-volume (D) tiling yet — a single volume larger than
    # the VMEM budget (e.g. 256^3 f32) needs a D-tiled variant with a one-plane
    # halo / carried seam plane.
    # TODO(synk): if W (lane dim) is very small while another spatial axis is
    # >=128, a producer-side permutation of the volume would improve lane use.

    partials = pl.pallas_call(
        kernel,
        out_shape=jax.ShapeDtypeStruct((num_blocks, H, W), jnp.float32),
        grid_spec=pltpu.PrefetchScalarGridSpec(
            num_scalar_prefetch=0,
            grid=(num_blocks,),
            in_specs=[pl.BlockSpec((tp, H, W), lambda b: (b, 0, 0))],
            out_specs=pl.BlockSpec((1, H, W), lambda b: (b, 0, 0)),
        ),
        compiler_params=pltpu.CompilerParams(
            dimension_semantics=("parallel",),   # no carried state across steps
            vmem_limit_bytes=vmem_limit),
    )(planes)

    # Tiny final reduction; partials are already divided by per-term counts.
    return jnp.sum(partials) / jnp.float32(3.0)


def _reference(x, penalty='l1'):
    x = x.astype(jnp.float32)
    dD = jnp.abs(x[:, :, 1:, :, :] - x[:, :, :-1, :, :])
    dH = jnp.abs(x[:, :, :, 1:, :] - x[:, :, :, :-1, :])
    dW = jnp.abs(x[:, :, :, :, 1:] - x[:, :, :, :, :-1])
    if penalty == 'l2':
        dD, dH, dW = dD * dD, dH * dH, dW * dW
    return (jnp.mean(dD) + jnp.mean(dH) + jnp.mean(dW)) / 3.0


if __name__ == "__main__":
    key = jax.random.PRNGKey(0)
    k1, k2 = jax.random.split(key)

    # Case 1: small NCDHW volume; B=6 splits into 2 parallel grid steps
    # (exact divisor, no ragged block); l1 and l2 penalties.
    x1 = jax.random.normal(k1, (2, 3, 5, 8, 24), dtype=jnp.float32)
    for pen in ('l1', 'l2'):
        got = jax.block_until_ready(gradient_loss(x1, penalty=pen))
        ref = _reference(x1, pen)
        assert jnp.allclose(got, ref, rtol=1e-4, atol=1e-6), (pen, got, ref)

    # Case 2: lane-dense W=128 with prime B=7 -> ragged last block (blocks of
    # 4 + 3 volumes) exercised with NO host-side padding copy.
    x2 = jax.random.normal(k2, (7, 1, 4, 16, 128), dtype=jnp.float32)
    vol = 4 * 16 * 128 * x2.dtype.itemsize
    got = jax.block_until_ready(
        gradient_loss(x2, penalty='l1', target_block_bytes=4 * vol))
    ref = _reference(x2, 'l1')
    assert jnp.allclose(got, ref, rtol=1e-4, atol=1e-6), (got, ref)

    print("KERNEL_OK")
</pallas_src>

<mosaic_0001>
module attributes {stable_mosaic.version = 11 : i64} {
  func.func @_grad_loss_kernel(%arg0: i32, %arg1: memref<15x8x24xf32, #tpu.memory_space<vmem>>, %arg2: memref<1x8x24xf32, #tpu.memory_space<vmem>>) attributes {dimension_semantics = [#tpu.dimension_semantics<parallel>], iteration_bounds = array<i64: 2>, scalar_prefetch = 0 : i64, scratch_operands = 0 : i64, tpu.core_type = #tpu.core_type<tc>, window_params = [{transform_indices = @transform_0, window_bounds = array<i64: 15, 8, 24>}, {transform_indices = @transform_1, window_bounds = array<i64: 1, 8, 24>}]} {
    %cst = arith.constant 0.000000e+00 : f32
    %0 = vector.broadcast %cst : f32 to vector<8x24xf32>
    %c0_i32 = arith.constant 0 : i32
    %c3_i32 = arith.constant 3 : i32
    %1 = arith.addi %c0_i32, %c3_i32 : i32
    %c1_i32 = arith.constant 1 : i32
    %2:3 = scf.for %arg3 = %c0_i32 to %1 step %c1_i32 iter_args(%arg4 = %0, %arg5 = %0, %arg6 = %0) -> (vector<8x24xf32>, vector<8x24xf32>, vector<8x24xf32>)  : i32 {
      %c5_i32 = arith.constant 5 : i32
      %26 = arith.muli %arg3, %c5_i32 : i32
      %27 = arith.index_cast %26 : i32 to index
      %c0_11 = arith.constant 0 : index
      %c0_12 = arith.constant 0 : index
      %28 = vector.load %arg1[%27, %c0_11, %c0_12] : memref<15x8x24xf32, #tpu.memory_space<vmem>>, vector<1x8x24xf32>
      %29 = vector.shape_cast %28 : vector<1x8x24xf32> to vector<8x24xf32>
      %c1_i32_13 = arith.constant 1 : i32
      %30 = tpu.dynamic_rotate %29 by %c1_i32_13 dim 0 : vector<8x24xf32>, i32 -> vector<8x24xf32>
      %31 = arith.subf %29, %30 : vector<8x24xf32>
      %32 = math.absf %31 : vector<8x24xf32>
      %33 = arith.addf %arg5, %32 : vector<8x24xf32>
      %c1_i32_14 = arith.constant 1 : i32
      %34 = tpu.dynamic_rotate %29 by %c1_i32_14 dim 1 : vector<8x24xf32>, i32 -> vector<8x24xf32>
      %35 = arith.subf %29, %34 : vector<8x24xf32>
      %36 = math.absf %35 : vector<8x24xf32>
      %37 = arith.addf %arg6, %36 : vector<8x24xf32>
      %c1_i32_15 = arith.constant 1 : i32
      %38 = arith.addi %26, %c1_i32_15 : i32
      %39 = arith.index_cast %38 : i32 to index
      %c0_16 = arith.constant 0 : index
      %c0_17 = arith.constant 0 : index
      %40 = vector.load %arg1[%39, %c0_16, %c0_17] : memref<15x8x24xf32, #tpu.memory_space<vmem>>, vector<1x8x24xf32>
      %41 = vector.shape_cast %40 : vector<1x8x24xf32> to vector<8x24xf32>
      %42 = arith.subf %41, %29 : vector<8x24xf32>
      %43 = math.absf %42 : vector<8x24xf32>
      %44 = arith.addf %arg4, %43 : vector<8x24xf32>
      %c1_i32_18 = arith.constant 1 : i32
      %45 = tpu.dynamic_rotate %41 by %c1_i32_18 dim 0 : vector<8x24xf32>, i32 -> vector<8x24xf32>
      %46 = arith.subf %41, %45 : vector<8x24xf32>
      %47 = math.absf %46 : vector<8x24xf32>
      %48 = arith.addf %33, %47 : vector<8x24xf32>
      %c1_i32_19 = arith.constant 1 : i32
      %49 = tpu.dynamic_rotate %41 by %c1_i32_19 dim 1 : vector<8x24xf32>, i32 -> vector<8x24xf32>
      %50 = arith.subf %41, %49 : vector<8x24xf32>
      %51 = math.absf %50 : vector<8x24xf32>
      %52 = arith.addf %37, %51 : vector<8x24xf32>
      %c2_i32 = arith.constant 2 : i32
      %53 = arith.addi %26, %c2_i32 : i32
      %54 = arith.index_cast %53 : i32 to index
      %c0_20 = arith.constant 0 : index
      %c0_21 = arith.constant 0 : index
      %55 = vector.load %arg1[%54, %c0_20, %c0_21] : memref<15x8x24xf32, #tpu.memory_space<vmem>>, vector<1x8x24xf32>
      %56 = vector.shape_cast %55 : vector<1x8x24xf32> to vector<8x24xf32>
      %57 = arith.subf %56, %41 : vector<8x24xf32>
      %58 = math.absf %57 : vector<8x24xf32>
      %59 = arith.addf %44, %58 : vector<8x24xf32>
      %c1_i32_22 = arith.constant 1 : i32
      %60 = tpu.dynamic_rotate %56 by %c1_i32_22 dim 0 : vector<8x24xf32>, i32 -> vector<8x24xf32>
      %61 = arith.subf %56, %60 : vector<8x24xf32>
      %62 = math.absf %61 : vector<8x24xf32>
      %63 = arith.addf %48, %62 : vector<8x24xf32>
      %c1_i32_23 = arith.constant 1 : i32
      %64 = tpu.dynamic_rotate %56 by %c1_i32_23 dim 1 : vector<8x24xf32>, i32 -> vector<8x24xf32>
      %65 = arith.subf %56, %64 : vector<8x24xf32>
      %66 = math.absf %65 : vector<8x24xf32>
      %67 = arith.addf %52, %66 : vector<8x24xf32>
      %c3_i32_24 = arith.constant 3 : i32
      %68 = arith.addi %26, %c3_i32_24 : i32
      %69 = arith.index_cast %68 : i32 to index
      %c0_25 = arith.constant 0 : index
      %c0_26 = arith.constant 0 : index
      %70 = vector.load %arg1[%69, %c0_25, %c0_26] : memref<15x8x24xf32, #tpu.memory_space<vmem>>, vector<1x8x24xf32>
      %71 = vector.shape_cast %70 : vector<1x8x24xf32> to vector<8x24xf32>
      %72 = arith.subf %71, %56 : vector<8x24xf32>
      %73 = math.absf %72 : vector<8x24xf32>
      %74 = arith.addf %59, %73 : vector<8x24xf32>
      %c1_i32_27 = arith.constant 1 : i32
      %75 = tpu.dynamic_rotate %71 by %c1_i32_27 dim 0 : vector<8x24xf32>, i32 -> vector<8x24xf32>
      %76 = arith.subf %71, %75 : vector<8x24xf32>
      %77 = math.absf %76 : vector<8x24xf32>
      %78 = arith.addf %63, %77 : vector<8x24xf32>
      %c1_i32_28 = arith.constant 1 : i32
      %79 = tpu.dynamic_rotate %71 by %c1_i32_28 dim 1 : vector<8x24xf32>, i32 -> vector<8x24xf32>
      %80 = arith.subf %71, %79 : vector<8x24xf32>
      %81 = math.absf %80 : vector<8x24xf32>
      %82 = arith.addf %67, %81 : vector<8x24xf32>
      %c4_i32 = arith.constant 4 : i32
      %83 = arith.addi %26, %c4_i32 : i32
      %84 = arith.index_cast %83 : i32 to index
      %c0_29 = arith.constant 0 : index
      %c0_30 = arith.constant 0 : index
      %85 = vector.load %arg1[%84, %c0_29, %c0_30] : memref<15x8x24xf32, #tpu.memory_space<vmem>>, vector<1x8x24xf32>
      %86 = vector.shape_cast %85 : vector<1x8x24xf32> to vector<8x24xf32>
      %87 = arith.subf %86, %71 : vector<8x24xf32>
      %88 = math.absf %87 : vector<8x24xf32>
      %89 = arith.addf %74, %88 : vector<8x24xf32>
      %c1_i32_31 = arith.constant 1 : i32
      %90 = tpu.dynamic_rotate %86 by %c1_i32_31 dim 0 : vector<8x24xf32>, i32 -> vector<8x24xf32>
      %91 = arith.subf %86, %90 : vector<8x24xf32>
      %92 = math.absf %91 : vector<8x24xf32>
      %93 = arith.addf %78, %92 : vector<8x24xf32>
      %c1_i32_32 = arith.constant 1 : i32
      %94 = tpu.dynamic_rotate %86 by %c1_i32_32 dim 1 : vector<8x24xf32>, i32 -> vector<8x24xf32>
      %95 = arith.subf %86, %94 : vector<8x24xf32>
      %96 = math.absf %95 : vector<8x24xf32>
      %97 = arith.addf %82, %96 : vector<8x24xf32>
      %c4_i32_33 = arith.constant 4 : i32
      scf.yield %89, %93, %97 : vector<8x24xf32>, vector<8x24xf32>, vector<8x24xf32>
    }
    %c3_i32_0 = arith.constant 3 : i32
    %cst_1 = arith.constant 0.000000e+00 : f32
    %3 = vector.broadcast %cst_1 : f32 to vector<8x24xf32>
    %cst_2 = arith.constant 2.17013891E-4 : f32
    %4 = vector.broadcast %cst_2 : f32 to vector<8x24xf32>
    %5 = arith.mulf %4, %2#0 : vector<8x24xf32>
    %6 = arith.addf %3, %5 : vector<8x24xf32>
    %7 = tpu.iota {dimensions = array<i32: 0>} : vector<8x24xi32>
    %c1_i32_3 = arith.constant 1 : i32
    %8 = vector.broadcast %c1_i32_3 : i32 to vector<8x24xi32>
    %9 = arith.cmpi sge, %7, %8 : vector<8x24xi32>
    %cst_4 = arith.constant 0.000000e+00 : f32
    %10 = vector.broadcast %cst_4 : f32 to vector<8x24xf32>
    %11 = arith.select %9, %2#1, %10 : vector<8x24xi1>, vector<8x24xf32>
    %cst_5 = arith.constant 1.98412701E-4 : f32
    %12 = vector.broadcast %cst_5 : f32 to vector<8x24xf32>
    %13 = arith.mulf %12, %11 : vector<8x24xf32>
    %14 = arith.addf %6, %13 : vector<8x24xf32>
    %15 = tpu.iota {dimensions = array<i32: 1>} : vector<8x24xi32>
    %c1_i32_6 = arith.constant 1 : i32
    %16 = vector.broadcast %c1_i32_6 : i32 to vector<8x24xi32>
    %17 = arith.cmpi sge, %15, %16 : vector<8x24xi32>
    %cst_7 = arith.constant 0.000000e+00 : f32
    %18 = vector.broadcast %cst_7 : f32 to vector<8x24xf32>
    %19 = arith.select %17, %2#2, %18 : vector<8x24xi1>, vector<8x24xf32>
    %cst_8 = arith.constant 1.81159427E-4 : f32
    %20 = vector.broadcast %cst_8 : f32 to vector<8x24xf32>
    %21 = arith.mulf %20, %19 : vector<8x24xf32>
    %22 = arith.addf %14, %21 : vector<8x24xf32>
    %c0 = arith.constant 0 : index
    %c0_9 = arith.constant 0 : index
    %c0_10 = arith.constant 0 : index
    %23 = vector.load %arg2[%c0, %c0_9, %c0_10] : memref<1x8x24xf32, #tpu.memory_space<vmem>>, vector<1x8x24xf32>
    %24 = vector.shape_cast %23 : vector<1x8x24xf32> to vector<8x24xf32>
    %25 = vector.shape_cast %22 : vector<8x24xf32> to vector<1x8x24xf32>
    tpu.vector_store %arg2[%c0, %c0_9, %c0_10], %25 {strides = array<i32>} : memref<1x8x24xf32, #tpu.memory_space<vmem>>, vector<1x8x24xf32>,
    return
  }
  func.func @transform_0(%arg0: i32) -> (i32, i32, i32) {
    %c0_i32 = arith.constant 0 : i32
    %c0_i32_0 = arith.constant 0 : i32
    %c0_i32_1 = arith.constant 0 : i32
    return %arg0, %c0_i32, %c0_i32_0 : i32, i32, i32
  }
  func.func @transform_1(%arg0: i32) -> (i32, i32, i32) {
    %c0_i32 = arith.constant 0 : i32
    %c0_i32_0 = arith.constant 0 : i32
    %c0_i32_1 = arith.constant 0 : i32
    return %arg0, %c0_i32, %c0_i32_0 : i32, i32, i32
  }
}

</mosaic_0001>

<llo_original>
// kernel: tpu_custom_call.1
$region0: #{tpu_custom_call.1}
  #allocation0 [shape = 'u32[]', space=smem, size = 0x4, offset = 0x4, fixed_abs, tag = 'smem constant byte address 0x4 - core index']
  #allocation1 [shape = 'u32[144,128]{1,0:T(1,128)}', space=vmem, size = 0x12000, scoped, tag = 'internal scratch']
  %s0 = inlined_call_operand.vmem [shape: f32[30,8,24], index: 0, kind: input, shape index: {}]
  %s1 = inlined_call_operand.hbm [shape: f32[2,8,24], index: 1, kind: output, shape index: {}]
  %s2 = sld [smem:[#allocation0]]
  $region44: #{tpu_custom_call.1} parent=0
    _
  %s4 = ssub.s32 1, %s2
  %s5 = scalar_select 0, %s4, %s2
  $region1: #{tpu_custom_call.1} parent=0
    #allocation2 [shape = 'u8[8192]{0}', space=vmem, size = 0x2000, scoped, tag = 'output window, operand 0']
    #allocation3 [shape = 's32[2]{0}', space=sflag, size = 0x8, scoped, tag = 'scoped memory for tpu_custom_call.1']
    %6 = vsyncpa [#allocation3], 0
    %s7 = scalar_lea.sflag [#allocation3], 1
    %8 = vsyncpa %s7, 0
    loop: start=0, step=1, limit=4
    $region2: #{tpu_custom_call.1} parent=1 // loop_pre_header
      _
    $region3: #{tpu_custom_call.1} parent=1 // loop_header
      %s10 = sphi 0, %s14
      %p11 = scmp.ge.s32.totalorder %s10, 4
      %s20 = sphi 0, %s22
      %s23 = sphi 0, %s20
      %s24 = sphi 0, %s23
      %s40 = sphi 0, %s24
      %s46 = sphi 0, %s48
      %s49 = sphi 0, %s46
      %s50 = sphi 0, %s49
      %s66 = sphi 0, %s50
    $region4: #{tpu_custom_call.1} parent=1 // loop_header_branch
      %13 = sbr.rel (%p11) target = $region8
    $region5: #{tpu_custom_call.1} parent=1 // loop_body
      %s15 = ssub.s32 %s10, 1
      %s16 = ssub.s32 %s10, 2
      %s17 = sadd.s32 %s10, 1
      %s18 = ssub.s32 %s10, %s17
      %p19 = scmp.eq.s32.totalorder %s18, 0
      %s21 = sadd.s32 %s20, 1
      %s22 = scalar_select %p19, %s20, %s21
      %p25 = pneg %p19
      %p26 = scmp.eq.s32.totalorder %s10, 1
      %p27 = por %p25, %p26
      %p28 = scmp.ne.s32.totalorder %s20, %s23
      %p29 = scmp.eq.s32.totalorder %s10, 0
      %p30 = por %p28, %p29
      %p31 = scmp.ne.s32.totalorder %s20, %s23
      %p32 = scmp.eq.s32.totalorder %s15, 1
      %p33 = por %p31, %p32
      %p34 = scmp.ne.s32.totalorder %s23, %s24
      %p35 = scmp.eq.s32.totalorder %s15, 0
      %p36 = por %p34, %p35
      %p37 = scmp.ne.s32.totalorder %s23, %s24
      %p38 = scmp.eq.s32.totalorder %s16, 1
      %p39 = por %p37, %p38
      %p41 = scmp.ne.s32.totalorder %s24, %s40
      %p42 = scmp.eq.s32.totalorder %s16, 0
      %p43 = por %p41, %p42
      %s44 = ssub.s32 %s10, %s17
      %p45 = scmp.eq.s32.totalorder %s44, 0
      %s47 = sadd.s32 %s46, 1
      %s48 = scalar_select %p45, %s46, %s47
      %p51 = pneg %p45
      %p52 = scmp.eq.s32.totalorder %s10, 1
      %p53 = por %p51, %p52
      %p54 = scmp.ne.s32.totalorder %s46, %s49
      %p55 = scmp.eq.s32.totalorder %s10, 0
      %p56 = por %p54, %p55
      %p57 = scmp.ne.s32.totalorder %s46, %s49
      %p58 = scmp.eq.s32.totalorder %s15, 1
      %p59 = por %p57, %p58
      %p60 = scmp.ne.s32.totalorder %s49, %s50
      %p61 = scmp.eq.s32.totalorder %s15, 0
      %p62 = por %p60, %p61
      %p63 = scmp.ne.s32.totalorder %s49, %s50
      %p64 = scmp.eq.s32.totalorder %s16, 1
      %p65 = por %p63, %p64
      %p67 = scmp.ne.s32.totalorder %s50, %s66
      %p68 = scmp.eq.s32.totalorder %s16, 0
      %p69 = por %p67, %p68
      %p70 = scmp.le.s32.totalorder 1, %s10
      %p71 = scmp.lt.s32.totalorder %s10, 3
      %p72 = pnand %p70, %p71
      %p73 = pneg %p72
      // Predicated region
      $region9: #{tpu_custom_call.1} parent=5 // pred_check
        _
      $region10: #{tpu_custom_call.1} parent=5 // pred_check_branch
        %75 = sbr.rel (%p72) target = $region12
      $region11: #{tpu_custom_call.1} parent=5 // pred_region
        %s76 = ssub.s32 %s10, 1
      $region12: #{tpu_custom_call.1} parent=5 // pred_fallthru
        _
      %p77 = scmp.lt.s32.totalorder %s10, 2
      // Predicated region
      $region13: #{tpu_custom_call.1} parent=5 // pred_check
        %p78 = pneg %p77
      $region14: #{tpu_custom_call.1} parent=5 // pred_check_branch
        %80 = sbr.rel (%p78) target = $region16
      $region15: #{tpu_custom_call.1} parent=5 // pred_region
        // Predicated region
        $region17: #{tpu_custom_call.1} parent=15 // pred_check
          %p81 = pneg %p30
        $region18: #{tpu_custom_call.1} parent=15 // pred_check_branch
          %83 = sbr.rel (%p81) target = $region20
        $region19: #{tpu_custom_call.1} parent=15 // pred_region
          %s84 = smul.u32 15, %s10
          %p85 = scmp.lt.s32.totalorder %s84, 29
          %s86 = scalar_select %p85, %s84, 29
          %s87 = smul.addr %s86, 8
          %s88 = scalar_lea.vmem %s0, %s87
          %s89 = smul.u32 15, %s10
        $region20: #{tpu_custom_call.1} parent=15 // pred_fallthru
          _
      $region16: #{tpu_custom_call.1} parent=5 // pred_fallthru
        _
      %p90 = scmp.le.s32.totalorder 1, %s10
      %p91 = scmp.lt.s32.totalorder %s10, 3
      %p92 = pnand %p90, %p91
      %p93 = pneg %p92
      // Predicated region
      $region21: #{tpu_custom_call.1} parent=5 // pred_check
        _
      $region22: #{tpu_custom_call.1} parent=5 // pred_check_branch
        %95 = sbr.rel (%p92) target = $region24
      $region23: #{tpu_custom_call.1} parent=5 // pred_region
        %s96 = ssub.s32 %s10, 1
        %s97 = smul.u32 15, %s15
        %p98 = scmp.lt.s32.totalorder %s97, 29
        %s99 = scalar_select %p98, %s97, 29
        %s100 = smul.addr %s99, 8
        %s101 = scalar_lea.vmem %s0, %s100
        %p102 = pneg %p36
        %p103 = pneg %p33
        %p104 = pneg %p62
        %p105 = pneg %p59
        %s106 = sand.u32 %s49, 1
        %s107 = scalar_lea.sflag [#allocation3], %s106
        %s108 = sand.u32 %s49, 1
        %s109 = smul.addr %s108, 8
        %s110 = scalar_lea.vmem [#allocation2], %s109
        %s111 = smul.u32 15, %s15
        %p112 = scmp.lt.s32.totalorder %s111, 29
        %s113 = scalar_select %p112, %s111, 29
        %s114 = smul.addr %s113, 8
        %s115 = scalar_lea.vmem %s0, %s114
        %s116 = smul.u32 15, %s15
        loop: start=0, step=1, limit=3
        $region25: #{tpu_custom_call.1} parent=23 // loop_pre_header
          _
        $region26: #{tpu_custom_call.1} parent=23 // loop_header
          %s118 = sphi 0, %s122
          %p119 = scmp.ge.s32.totalorder %s118, 3
          %v123 = vphi 0.0, %v226
          %v124 = vphi 0.0, %v230
          %v125 = vphi 0.0, %v243
        $region27: #{tpu_custom_call.1} parent=23 // loop_header_branch
          %121 = sbr.rel (%p119) target = $region31
        $region28: #{tpu_custom_call.1} parent=23 // loop_body
          %s126 = smul.u32 %s118, 5
          %s127 = smul.u32 %s126, 8
          %s128 = scalar_lea.vmem %s115, %s127
          %v129 = vld [vmem:[%s128] sm:$0xff]
          %v130 = vrot.slane %v129, 7
          %v131 = vsub.f32 %v129, %v130
          %v132 = vand.u32 2147483647, %v131
          %v133 = vadd.f32 %v124, %v132
          %vm134 = vcmask 1047744
          %135 = vrot.lane.b32.xlu0 %v129, 24
          %v136 = vpop.permute.xlu0 %135
          %v137 = vsel %vm134, %v136, %v129
          %138 = vrot.lane.b32.xlu0 %v137, 24
          %v139 = vpop.permute.xlu0 %138
          %v140 = vsel %vm134, %v139, %v129
          %142 = vrot.lane.b32.xlu0 %v140, 105
          %v143 = vpop.permute.xlu0 %142
          %v145 = vsub.f32 %v129, %v143
          %v146 = vand.u32 2147483647, %v145
          %v147 = vadd.f32 %v125, %v146
          %s148 = sadd.s32 %s126, 1
          %s149 = smul.u32 %s148, 8
          %s150 = scalar_lea.vmem %s115, %s149
          %v151 = vld [vmem:[%s150] sm:$0xff]
          %v152 = vsub.f32 %v151, %v129
          %v153 = vand.u32 2147483647, %v152
          %v154 = vadd.f32 %v123, %v153
          %v155 = vrot.slane %v151, 7
          %v156 = vsub.f32 %v151, %v155
          %v157 = vand.u32 2147483647, %v156
          %v158 = vadd.f32 %v133, %v157
          %159 = vrot.lane.b32.xlu0 %v151, 24
          %v160 = vpop.permute.xlu0 %159
          %v161 = vsel %vm134, %v160, %v151
          %162 = vrot.lane.b32.xlu0 %v161, 24
          %v163 = vpop.permute.xlu0 %162
          %v164 = vsel %vm134, %v163, %v151
          %166 = vrot.lane.b32.xlu0 %v164, 105
          %v167 = vpop.permute.xlu0 %166
          %v169 = vsub.f32 %v151, %v167
          %v170 = vand.u32 2147483647, %v169
          %v171 = vadd.f32 %v147, %v170
          %s172 = sadd.s32 %s126, 2
          %s173 = smul.u32 %s172, 8
          %s174 = scalar_lea.vmem %s115, %s173
          %v175 = vld [vmem:[%s174] sm:$0xff]
          %v176 = vsub.f32 %v175, %v151
          %v177 = vand.u32 2147483647, %v176
          %v178 = vadd.f32 %v154, %v177
          %v179 = vrot.slane %v175, 7
          %v180 = vsub.f32 %v175, %v179
          %v181 = vand.u32 2147483647, %v180
          %v182 = vadd.f32 %v158, %v181
          %183 = vrot.lane.b32.xlu0 %v175, 24
          %v184 = vpop.permute.xlu0 %183
          %v185 = vsel %vm134, %v184, %v175
          %186 = vrot.lane.b32.xlu0 %v185, 24
          %v187 = vpop.permute.xlu0 %186
          %v188 = vsel %vm134, %v187, %v175
          %190 = vrot.lane.b32.xlu0 %v188, 105
          %v191 = vpop.permute.xlu0 %190
          %v193 = vsub.f32 %v175, %v191
          %v194 = vand.u32 2147483647, %v193
          %v195 = vadd.f32 %v171, %v194
          %s196 = sadd.s32 %s126, 3
          %s197 = smul.u32 %s196, 8
          %s198 = scalar_lea.vmem %s115, %s197
          %v199 = vld [vmem:[%s198] sm:$0xff]
          %v200 = vsub.f32 %v199, %v175
          %v201 = vand.u32 2147483647, %v200
          %v202 = vadd.f32 %v178, %v201
          %v203 = vrot.slane %v199, 7
          %v204 = vsub.f32 %v199, %v203
          %v205 = vand.u32 2147483647, %v204
          %v206 = vadd.f32 %v182, %v205
          %207 = vrot.lane.b32.xlu0 %v199, 24
          %v208 = vpop.permute.xlu0 %207
          %v209 = vsel %vm134, %v208, %v199
          %210 = vrot.lane.b32.xlu0 %v209, 24
          %v211 = vpop.permute.xlu0 %210
          %v212 = vsel %vm134, %v211, %v199
          %214 = vrot.lane.b32.xlu0 %v212, 105
          %v215 = vpop.permute.xlu0 %214
          %v217 = vsub.f32 %v199, %v215
          %v218 = vand.u32 2147483647, %v217
          %v219 = vadd.f32 %v195, %v218
          %s220 = sadd.s32 %s126, 4
          %s221 = smul.u32 %s220, 8
          %s222 = scalar_lea.vmem %s115, %s221
          %v223 = vld [vmem:[%s222] sm:$0xff]
          %v224 = vsub.f32 %v223, %v199
          %v225 = vand.u32 2147483647, %v224
          %v226 = vadd.f32 %v202, %v225
          %v227 = vrot.slane %v223, 7
          %v228 = vsub.f32 %v223, %v227
          %v229 = vand.u32 2147483647, %v228
          %v230 = vadd.f32 %v206, %v229
          %231 = vrot.lane.b32.xlu0 %v223, 24
          %v232 = vpop.permute.xlu0 %231
          %v233 = vsel %vm134, %v232, %v223
          %234 = vrot.lane.b32.xlu0 %v233, 24
          %v235 = vpop.permute.xlu0 %234
          %v236 = vsel %vm134, %v235, %v223
          %238 = vrot.lane.b32.xlu0 %v236, 105
          %v239 = vpop.permute.xlu0 %238
          %v241 = vsub.f32 %v223, %v239
          %v242 = vand.u32 2147483647, %v241
          %v243 = vadd.f32 %v219, %v242
        $region29: #{tpu_custom_call.1} parent=23 // loop_footer
          %s122 = sadd.s32 1, %s118
        $region30: #{tpu_custom_call.1} parent=23 // loop_footer_branch
          %117 = sbr.rel target = $region26
        $region31: #{tpu_custom_call.1} parent=23 // loop_exit
          _
        %v244 = vmul.f32 %v123, 0.00021701389
        %v245 = vadd.f32 %v244, 0.0
        %v246 = vlaneseq
        %v247 = vshrl.u32 %v246, 7
        %vm248 = vcmp.ge.s32.totalorder %v247, 1
        %v249 = vsel %vm248, %v124, 0.0
        %v250 = vmul.f32 %v249, 0.0001984127
        %v251 = vadd.f32 %v245, %v250
        %v252 = vlaneseq
        %v253 = vand.u32 %v252, 127
        %vm254 = vcmp.ge.s32.totalorder %v253, 1
        %v255 = vsel %vm254, %v125, 0.0
        %v256 = vmul.f32 %v255, 0.00018115943
        %v257 = vadd.f32 %v251, %v256
        %vm258 = vcmask 195584
        %259 = vst.msk [vmem:[%s110] sm:$0xff] %vm258, %v257
        %s260 = sand.u32 %s49, 1
        %s261 = scalar_lea.sflag [#allocation3], %s260
        %s262 = sand.u32 %s49, 1
        %s263 = smul.addr %s262, 8
        %s264 = scalar_lea.vmem [#allocation2], %s263
        // Predicated region
        $region32: #{tpu_custom_call.1} parent=23 // pred_check
          %p265 = pneg %p59
        $region33: #{tpu_custom_call.1} parent=23 // pred_check_branch
          %267 = sbr.rel (%p265) target = $region35
        $region34: #{tpu_custom_call.1} parent=23 // pred_region
          %s269 = ssub.s32 128, 128
          %270 = vsyncadd %s261, %s269
          %s271 = smul.addr %s15, 128
          %s272 = scalar_lea.hbm %s1, %s271
          %s274 = sshll.u32 %s264, 4
          %s275 = int_to_ptr.vmem [resolvable:$true] %s274
          %277 = dma.vmem_to_hbm [thread:$0]  %s275, 128, %s272, %s261
        $region35: #{tpu_custom_call.1} parent=23 // pred_fallthru
          _
      $region24: #{tpu_custom_call.1} parent=5 // pred_fallthru
        _
      %p278 = scmp.le.s32.totalorder 2, %s10
      // Predicated region
      $region36: #{tpu_custom_call.1} parent=5 // pred_check
        %p279 = pneg %p278
      $region37: #{tpu_custom_call.1} parent=5 // pred_check_branch
        %281 = sbr.rel (%p279) target = $region39
      $region38: #{tpu_custom_call.1} parent=5 // pred_region
        %s282 = ssub.s32 %s10, 2
        // Predicated region
        $region40: #{tpu_custom_call.1} parent=38 // pred_check
          %p283 = pneg %p65
        $region41: #{tpu_custom_call.1} parent=38 // pred_check_branch
          %285 = sbr.rel (%p283) target = $region43
        $region42: #{tpu_custom_call.1} parent=38 // pred_region
          %s286 = sand.u32 %s50, 1
          %s287 = scalar_lea.sflag [#allocation3], %s286
          %s288 = sand.u32 %s50, 1
          %s289 = smul.addr %s288, 8
          %s290 = scalar_lea.vmem [#allocation2], %s289
          %291 = dma.done %s287, 128
        $region43: #{tpu_custom_call.1} parent=38 // pred_fallthru
          _
      $region39: #{tpu_custom_call.1} parent=5 // pred_fallthru
        _
    $region6: #{tpu_custom_call.1} parent=1 // loop_footer
      %s14 = sadd.s32 1, %s10
    $region7: #{tpu_custom_call.1} parent=1 // loop_footer_branch
      %9 = sbr.rel target = $region3
    $region8: #{tpu_custom_call.1} parent=1 // loop_exit
      _
    %292 = vsyncpa [#allocation3], 1
    %s293 = scalar_lea.sflag [#allocation3], 1
    %294 = vsyncpa %s293, 1

</llo_original>
